<compile_context>
chip_gen: v5e
topology: v5e:2x2
jax: 0.10.0
libtpu: 0.0.40
codegen_flags: <defaults>
</compile_context>

<pallas_src>
import functools

import jax
import jax.numpy as jnp
from jax.experimental import pallas as pl
from jax.experimental.pallas import tpu as pltpu

_LANE = 128
_SUBLANE = 8


def _round_up(v, m):
    return ((v + m - 1) // m) * m


def _vmem_budget_and_limit():
    """Generation-aware (per-step tile budget, scoped vmem limit) in bytes."""
    cap = None
    try:
        info = pltpu.get_tpu_info()
        for attr in ("vmem_capacity_bytes", "vmem_bytes", "vmem_size_bytes"):
            v = getattr(info, attr, None)
            if v:
                cap = int(v)
                break
    except Exception:
        cap = None
    if cap is None:
        cap = 64 << 20  # assume the smallest (v7x) part
    if cap >= (128 << 20):        # v5e / v6e: 128 MiB physical — go bigger
        return 16 << 20, 64 << 20
    return 8 << 20, 32 << 20      # v7x: 64 MiB physical — stay conservative


def _plan_feature_tile(n, f, bytes_per_row_per_lane, budget):
    """Lane-tile width for a fused (N, tile_f) block; None if it can't fit.

    Per-step VMEM ~= n * bytes_per_row_per_lane * tile_f.
    """
    min_tf = min(f, _LANE)
    max_tf = budget // max(n * bytes_per_row_per_lane, 1)
    if max_tf < min_tf:
        return None
    if f <= max_tf:
        tile_f = f
        # Give the grid >=2 feature steps when F allows it (v7x megacore).
        if f >= 2 * _LANE:
            tile_f = _round_up(pl.cdiv(f, 2), _LANE)
        return tile_f
    return max(_LANE, (max_tf // _LANE) * _LANE)


def _plan_nf_tiles(n, f, bytes_per_elem, budget):
    """(tile_n, tile_f) for 2-D (batch, feature) grids, VMEM-bounded."""
    max_elems = max(budget // max(bytes_per_elem, 1), _SUBLANE * _LANE)
    # Lane tile: full F unless that forces the batch tile below 8 rows.
    tf_cap = max(_LANE, ((max_elems // _SUBLANE) // _LANE) * _LANE)
    tile_f = f if f <= tf_cap else tf_cap
    tile_n = max_elems // max(tile_f, 1)
    if tile_n >= n:
        tile_n = n
    else:
        tile_n = max(_SUBLANE, (tile_n // _SUBLANE) * _SUBLANE)
    # Try to give the grid >=2 steps so both v7x TensorCores get work.
    if pl.cdiv(n, tile_n) * pl.cdiv(f, tile_f) == 1:
        if f >= 2 * _LANE:
            tile_f = _round_up(pl.cdiv(f, 2), _LANE)
        elif n >= 2 * _SUBLANE:
            tile_n = _round_up(pl.cdiv(n, 2), _SUBLANE)
    return tile_n, tile_f


# ----------------------------- kernels --------------------------------------


def _bn_train_fused_kernel(x_ref, gamma_ref, beta_ref, rm_ref, rv_ref,
                           y_ref, rm_out_ref, rv_out_ref, *, eps, momentum):
    """Single-pass training BN over a (N, tile_f) feature tile."""
    x = x_ref[...].astype(jnp.float32)                    # (N, tile_f)
    n = x.shape[0]                                        # static
    inv_n = 1.0 / n
    inv_nm1 = 1.0 / (n - 1)

    mean = jnp.sum(x, axis=0, keepdims=True) * inv_n      # (1, tile_f)
    diff = x - mean
    ss = jnp.sum(diff * diff, axis=0, keepdims=True)      # shared reduction
    var = ss * inv_n                                      # biased
    var_unb = ss * inv_nm1                                # unbiased

    gamma = gamma_ref[...].astype(jnp.float32)
    beta = beta_ref[...].astype(jnp.float32)
    inv_std = jax.lax.rsqrt(var + eps)
    scale = gamma * inv_std                               # fold affine
    shift = beta - mean * scale
    y_ref[...] = (x * scale + shift).astype(y_ref.dtype)  # 2 VALU ops/elem

    rm = rm_ref[...].astype(jnp.float32)
    rv = rv_ref[...].astype(jnp.float32)
    rm_out_ref[...] = ((1.0 - momentum) * rm + momentum * mean
                       ).astype(rm_out_ref.dtype)
    rv_out_ref[...] = ((1.0 - momentum) * rv + momentum * var_unb
                       ).astype(rv_out_ref.dtype)


def _bn_stats_kernel(x_ref, sum_ref, ssq_ref, *, n_valid, tile_n, need_mask):
    """Batch-tiled per-feature sum / sum-of-squares accumulation."""
    b = pl.program_id(1)

    @pl.when(b == 0)
    def _():
        sum_ref[...] = jnp.zeros_like(sum_ref)
        ssq_ref[...] = jnp.zeros_like(ssq_ref)

    x = x_ref[...].astype(jnp.float32)
    if need_mask:  # last batch tile: zero out-of-range rows before reducing
        row = jax.lax.broadcasted_iota(jnp.int32, x.shape, 0) + b * tile_n
        x = jnp.where(row < n_valid, x, 0.0)
    sum_ref[...] = sum_ref[...] + jnp.sum(x, axis=0, keepdims=True)
    ssq_ref[...] = ssq_ref[...] + jnp.sum(x * x, axis=0, keepdims=True)


def _bn_apply_kernel(x_ref, scale_ref, shift_ref, y_ref):
    """Elementwise y = x * scale + shift over a (tile_n, tile_f) block."""
    x = x_ref[...].astype(jnp.float32)
    y_ref[...] = (x * scale_ref[...] + shift_ref[...]).astype(y_ref.dtype)


# ------------------------- launch helpers ------------------------------------


def _bn_apply(x, scale, shift, budget, vmem_limit):
    n, f = x.shape
    isz = jnp.dtype(x.dtype).itemsize
    # 2x x-in + 2x y-out double buffers + f32 upcast temp, per element.
    tile_n, tile_f = _plan_nf_tiles(n, f, bytes_per_elem=4 * isz + 4,
                                    budget=budget)
    grid = (pl.cdiv(n, tile_n), pl.cdiv(f, tile_f))
    x_spec = pl.BlockSpec((tile_n, tile_f), lambda i, j: (i, j))
    row_spec = pl.BlockSpec((1, tile_f), lambda i, j: (0, j))
    cost = pl.CostEstimate(flops=2 * n * f, transcendentals=0,
                           bytes_accessed=2 * n * f * isz + 2 * f * 4)
    return pl.pallas_call(
        _bn_apply_kernel,
        grid=grid,
        in_specs=[x_spec, row_spec, row_spec],
        out_specs=x_spec,
        out_shape=jax.ShapeDtypeStruct((n, f), x.dtype),
        compiler_params=pltpu.CompilerParams(
            dimension_semantics=("parallel", "parallel"),
            vmem_limit_bytes=vmem_limit),
        cost_estimate=cost,
    )(x, scale, shift)


@functools.partial(jax.jit,
                   static_argnames=("eps", "momentum", "budget_override"))
def _bn_train_forward(x, gamma, beta, rm, rv, *, eps, momentum,
                      budget_override=None):
    n, f = x.shape
    budget, vmem_limit = _vmem_budget_and_limit()
    if budget_override is not None:
        budget = budget_override
    isz = jnp.dtype(x.dtype).itemsize

    gamma2 = gamma.reshape(1, f).astype(jnp.float32)
    beta2 = beta.reshape(1, f).astype(jnp.float32)
    rm2 = rm.reshape(1, f).astype(jnp.float32)
    rv2 = rv.reshape(1, f).astype(jnp.float32)

    # Fused-kernel footprint per row per lane:
    #   2x x-in + 2x y-out double buffers + f32 upcast of x + diff temp.
    bytes_per_row_per_lane = 4 * isz + 4 + 4
    tile_f = _plan_feature_tile(n, f, bytes_per_row_per_lane, budget)

    if tile_f is not None:
        # ---- single-pass path: whole batch per feature tile (2 HBM passes) --
        grid = (pl.cdiv(f, tile_f),)
        x_spec = pl.BlockSpec((n, tile_f), lambda j: (0, j))
        row_spec = pl.BlockSpec((1, tile_f), lambda j: (0, j))
        cost = pl.CostEstimate(flops=10 * n * f, transcendentals=f,
                               bytes_accessed=2 * n * f * isz + 7 * f * 4)
        y, rm_new, rv_new = pl.pallas_call(
            functools.partial(_bn_train_fused_kernel, eps=eps,
                              momentum=momentum),
            grid=grid,
            in_specs=[x_spec, row_spec, row_spec, row_spec, row_spec],
            out_specs=(x_spec, row_spec, row_spec),
            out_shape=(
                jax.ShapeDtypeStruct((n, f), x.dtype),
                jax.ShapeDtypeStruct((1, f), jnp.float32),
                jax.ShapeDtypeStruct((1, f), jnp.float32),
            ),
            compiler_params=pltpu.CompilerParams(
                dimension_semantics=("parallel",),
                vmem_limit_bytes=vmem_limit),
            cost_estimate=cost,
        )(x, gamma2, beta2, rm2, rv2)
        return y, rm_new.reshape(f), rv_new.reshape(f)

    # ---- large-N path: batch-tiled stats pass + elementwise apply pass ------
    # TODO(synk): this path computes var = E[x^2] - mean^2 (slight cancellation
    # risk vs. the reference's two-pass variance for extreme data ranges).
    tile_n, tf = _plan_nf_tiles(n, f, bytes_per_elem=2 * isz + 4 + 4,
                                budget=budget)
    grid = (pl.cdiv(f, tf), pl.cdiv(n, tile_n))
    row_spec = pl.BlockSpec((1, tf), lambda j, b: (0, j))
    cost = pl.CostEstimate(flops=4 * n * f, transcendentals=0,
                           bytes_accessed=n * f * isz + 2 * f * 4)
    s, ssq = pl.pallas_call(
        functools.partial(_bn_stats_kernel, n_valid=n, tile_n=tile_n,
                          need_mask=(n % tile_n) != 0),
        grid=grid,
        in_specs=[pl.BlockSpec((tile_n, tf), lambda j, b: (b, j))],
        out_specs=(row_spec, row_spec),
        out_shape=(jax.ShapeDtypeStruct((1, f), jnp.float32),
                   jax.ShapeDtypeStruct((1, f), jnp.float32)),
        compiler_params=pltpu.CompilerParams(
            dimension_semantics=("parallel", "arbitrary"),
            vmem_limit_bytes=vmem_limit),
        cost_estimate=cost,
    )(x)

    inv_n = 1.0 / n
    mean = s * inv_n
    ss = jnp.maximum(ssq - n * mean * mean, 0.0)
    var = ss * inv_n
    var_unb = ss * (1.0 / (n - 1))
    rm_new = (1.0 - momentum) * rm2 + momentum * mean
    rv_new = (1.0 - momentum) * rv2 + momentum * var_unb
    scale = gamma2 * jax.lax.rsqrt(var + eps)
    shift = beta2 - mean * scale
    y = _bn_apply(x, scale, shift, budget, vmem_limit)
    return y, rm_new.reshape(f), rv_new.reshape(f)


@functools.partial(jax.jit, static_argnames=("eps",))
def _bn_eval_forward(x, gamma, beta, rm, rv, *, eps):
    n, f = x.shape
    budget, vmem_limit = _vmem_budget_and_limit()
    gamma2 = gamma.reshape(1, f).astype(jnp.float32)
    beta2 = beta.reshape(1, f).astype(jnp.float32)
    rm2 = rm.reshape(1, f).astype(jnp.float32)
    rv2 = rv.reshape(1, f).astype(jnp.float32)
    # F-length scale/shift precompute is negligible; kernel stays 2-op/elem.
    scale = gamma2 * jax.lax.rsqrt(rv2 + eps)
    shift = beta2 - rm2 * scale
    return _bn_apply(x, scale, shift, budget, vmem_limit)


# ------------------------------- module --------------------------------------


class BatchNorm1d:
    """Pallas-backed BatchNorm1d matching the mytorch reference semantics."""

    def __init__(self, num_features, eps=1e-5, momentum=0.1):
        self.num_features = num_features
        self.eps = float(eps)
        self.momentum = float(momentum)
        self.gamma = jnp.ones((num_features,), jnp.float32)
        self.beta = jnp.zeros((num_features,), jnp.float32)
        self.running_mean = jnp.zeros((num_features,), jnp.float32)
        self.running_var = jnp.ones((num_features,), jnp.float32)
        self.is_train = True

    def __call__(self, x):
        return self.forward(x)

    def forward(self, x):
        N, F = x.shape
        assert F == self.num_features
        if self.is_train:
            assert N > 1, "BatchNorm1d training requires batch_size > 1"
            y, rm_new, rv_new = _bn_train_forward(
                x, self.gamma, self.beta, self.running_mean, self.running_var,
                eps=self.eps, momentum=self.momentum)
            # Running-stats update is a side effect of the training forward.
            self.running_mean = rm_new
            self.running_var = rv_new
            return y
        return _bn_eval_forward(
            x, self.gamma, self.beta, self.running_mean, self.running_var,
            eps=self.eps)


# ------------------------------ reference ------------------------------------


def _reference_train(x, gamma, beta, rm, rv, eps, momentum):
    n = x.shape[0]
    mean = x.sum(axis=0) / n
    diff = x - mean
    var = (diff ** 2).sum(axis=0) / n
    var_unb = (diff ** 2).sum(axis=0) / (n - 1)
    rm_new = (1.0 - momentum) * rm + momentum * mean
    rv_new = (1.0 - momentum) * rv + momentum * var_unb
    y = gamma * (diff / jnp.sqrt(var + eps)) + beta
    return y, rm_new, rv_new


if __name__ == "__main__":
    key = jax.random.PRNGKey(0)
    N, F = 8, 32  # (batch_size, num_features)
    x = jax.random.normal(key, (N, F), dtype=jnp.float32) * 2.0 + 0.5

    bn = BatchNorm1d(F)

    # --- training-mode forward (fused single-pass path) ---
    y_train = bn(x)
    jax.block_until_ready(y_train)

    y_ref, rm_ref, rv_ref = _reference_train(
        x, jnp.ones((F,)), jnp.zeros((F,)), jnp.zeros((F,)), jnp.ones((F,)),
        bn.eps, bn.momentum)
    assert jnp.allclose(y_train, y_ref, atol=1e-4, rtol=1e-4)
    assert jnp.allclose(bn.running_mean, rm_ref, atol=1e-5, rtol=1e-5)
    assert jnp.allclose(bn.running_var, rv_ref, atol=1e-5, rtol=1e-5)

    # --- eval-mode forward (uses updated running stats) ---
    bn.is_train = False
    y_eval = bn(x)
    jax.block_until_ready(y_eval)
    y_eval_ref = (x - rm_ref) / jnp.sqrt(rv_ref + bn.eps)  # gamma=1, beta=0
    assert jnp.allclose(y_eval, y_eval_ref, atol=1e-4, rtol=1e-4)

    # --- exercise the large-N (batch-tiled two-phase) training path by
    #     forcing a tiny tile budget; compare slightly looser (sum/sumsq var).
    y2, rm2, rv2 = _bn_train_forward(
        x, jnp.ones((F,)), jnp.zeros((F,)), jnp.zeros((F,)), jnp.ones((F,)),
        eps=bn.eps, momentum=bn.momentum, budget_override=4096)
    jax.block_until_ready(y2)
    assert jnp.allclose(y2, y_ref, atol=1e-3, rtol=1e-3)
    assert jnp.allclose(rm2, rm_ref, atol=1e-4, rtol=1e-4)
    assert jnp.allclose(rv2, rv_ref, atol=1e-3, rtol=1e-3)

    print("KERNEL_OK")
</pallas_src>

<mosaic_0001>
module attributes {stable_mosaic.version = 11 : i64} {
  func.func @_bn_train_fused_kernel(%arg0: i32, %arg1: memref<8x32xf32, #tpu.memory_space<vmem>>, %arg2: memref<1x32xf32, #tpu.memory_space<vmem>>, %arg3: memref<1x32xf32, #tpu.memory_space<vmem>>, %arg4: memref<1x32xf32, #tpu.memory_space<vmem>>, %arg5: memref<1x32xf32, #tpu.memory_space<vmem>>, %arg6: memref<8x32xf32, #tpu.memory_space<vmem>>, %arg7: memref<1x32xf32, #tpu.memory_space<vmem>>, %arg8: memref<1x32xf32, #tpu.memory_space<vmem>>) attributes {dimension_semantics = [#tpu.dimension_semantics<parallel>], iteration_bounds = array<i64: 1>, scalar_prefetch = 0 : i64, scratch_operands = 0 : i64, tpu.core_type = #tpu.core_type<tc>, window_params = [{transform_indices = @transform_0, window_bounds = array<i64: 8, 32>}, {transform_indices = @transform_1, window_bounds = array<i64: 1, 32>}, {transform_indices = @transform_2, window_bounds = array<i64: 1, 32>}, {transform_indices = @transform_3, window_bounds = array<i64: 1, 32>}, {transform_indices = @transform_4, window_bounds = array<i64: 1, 32>}, {transform_indices = @transform_5, window_bounds = array<i64: 8, 32>}, {transform_indices = @transform_6, window_bounds = array<i64: 1, 32>}, {transform_indices = @transform_7, window_bounds = array<i64: 1, 32>}]} {
    %c0 = arith.constant 0 : index
    %c0_0 = arith.constant 0 : index
    %0 = vector.load %arg1[%c0, %c0_0] : memref<8x32xf32, #tpu.memory_space<vmem>>, vector<8x32xf32>
    %cst = arith.constant dense<0.000000e+00> : vector<32xf32>
    %1 = vector.multi_reduction <add>, %0, %cst [0] : vector<8x32xf32> to vector<32xf32>
    %2 = vector.shape_cast %1 : vector<32xf32> to vector<1x32xf32>
    %cst_1 = arith.constant 1.250000e-01 : f32
    %3 = vector.broadcast %cst_1 : f32 to vector<1x32xf32>
    %4 = arith.mulf %2, %3 : vector<1x32xf32>
    %5 = vector.broadcast %4 : vector<1x32xf32> to vector<8x32xf32>
    %6 = arith.subf %0, %5 : vector<8x32xf32>
    %7 = arith.mulf %6, %6 : vector<8x32xf32>
    %cst_2 = arith.constant dense<0.000000e+00> : vector<32xf32>
    %8 = vector.multi_reduction <add>, %7, %cst_2 [0] : vector<8x32xf32> to vector<32xf32>
    %9 = vector.shape_cast %8 : vector<32xf32> to vector<1x32xf32>
    %cst_3 = arith.constant 1.250000e-01 : f32
    %10 = vector.broadcast %cst_3 : f32 to vector<1x32xf32>
    %11 = arith.mulf %9, %10 : vector<1x32xf32>
    %cst_4 = arith.constant 0.142857149 : f32
    %12 = vector.broadcast %cst_4 : f32 to vector<1x32xf32>
    %13 = arith.mulf %9, %12 : vector<1x32xf32>
    %c0_5 = arith.constant 0 : index
    %c0_6 = arith.constant 0 : index
    %14 = vector.load %arg2[%c0_5, %c0_6] : memref<1x32xf32, #tpu.memory_space<vmem>>, vector<1x32xf32>
    %c0_7 = arith.constant 0 : index
    %c0_8 = arith.constant 0 : index
    %15 = vector.load %arg3[%c0_7, %c0_8] : memref<1x32xf32, #tpu.memory_space<vmem>>, vector<1x32xf32>
    %cst_9 = arith.constant 9.99999974E-6 : f32
    %16 = vector.broadcast %cst_9 : f32 to vector<1x32xf32>
    %17 = arith.addf %11, %16 : vector<1x32xf32>
    %18 = math.rsqrt %17 : vector<1x32xf32>
    %19 = arith.mulf %14, %18 : vector<1x32xf32>
    %20 = arith.mulf %4, %19 : vector<1x32xf32>
    %21 = arith.subf %15, %20 : vector<1x32xf32>
    %22 = vector.broadcast %19 : vector<1x32xf32> to vector<8x32xf32>
    %23 = arith.mulf %0, %22 : vector<8x32xf32>
    %24 = vector.broadcast %21 : vector<1x32xf32> to vector<8x32xf32>
    %25 = arith.addf %23, %24 : vector<8x32xf32>
    %c0_10 = arith.constant 0 : index
    %c0_11 = arith.constant 0 : index
    %26 = vector.load %arg6[%c0_10, %c0_11] : memref<8x32xf32, #tpu.memory_space<vmem>>, vector<8x32xf32>
    tpu.vector_store %arg6[%c0_10, %c0_11], %25 {strides = array<i32>} : memref<8x32xf32, #tpu.memory_space<vmem>>, vector<8x32xf32>,
    %c0_12 = arith.constant 0 : index
    %c0_13 = arith.constant 0 : index
    %27 = vector.load %arg4[%c0_12, %c0_13] : memref<1x32xf32, #tpu.memory_space<vmem>>, vector<1x32xf32>
    %c0_14 = arith.constant 0 : index
    %c0_15 = arith.constant 0 : index
    %28 = vector.load %arg5[%c0_14, %c0_15] : memref<1x32xf32, #tpu.memory_space<vmem>>, vector<1x32xf32>
    %cst_16 = arith.constant 0.899999976 : f32
    %29 = vector.broadcast %cst_16 : f32 to vector<1x32xf32>
    %30 = arith.mulf %29, %27 : vector<1x32xf32>
    %cst_17 = arith.constant 1.000000e-01 : f32
    %31 = vector.broadcast %cst_17 : f32 to vector<1x32xf32>
    %32 = arith.mulf %31, %4 : vector<1x32xf32>
    %33 = arith.addf %30, %32 : vector<1x32xf32>
    %c0_18 = arith.constant 0 : index
    %c0_19 = arith.constant 0 : index
    %34 = vector.load %arg7[%c0_18, %c0_19] : memref<1x32xf32, #tpu.memory_space<vmem>>, vector<1x32xf32>
    tpu.vector_store %arg7[%c0_18, %c0_19], %33 {strides = array<i32>} : memref<1x32xf32, #tpu.memory_space<vmem>>, vector<1x32xf32>,
    %cst_20 = arith.constant 0.899999976 : f32
    %35 = vector.broadcast %cst_20 : f32 to vector<1x32xf32>
    %36 = arith.mulf %35, %28 : vector<1x32xf32>
    %cst_21 = arith.constant 1.000000e-01 : f32
    %37 = vector.broadcast %cst_21 : f32 to vector<1x32xf32>
    %38 = arith.mulf %37, %13 : vector<1x32xf32>
    %39 = arith.addf %36, %38 : vector<1x32xf32>
    %c0_22 = arith.constant 0 : index
    %c0_23 = arith.constant 0 : index
    %40 = vector.load %arg8[%c0_22, %c0_23] : memref<1x32xf32, #tpu.memory_space<vmem>>, vector<1x32xf32>
    tpu.vector_store %arg8[%c0_22, %c0_23], %39 {strides = array<i32>} : memref<1x32xf32, #tpu.memory_space<vmem>>, vector<1x32xf32>,
    return
  }
  func.func @transform_0(%arg0: i32) -> (i32, i32) {
    %c0_i32 = arith.constant 0 : i32
    %c0_i32_0 = arith.constant 0 : i32
    return %c0_i32, %arg0 : i32, i32
  }
  func.func @transform_1(%arg0: i32) -> (i32, i32) {
    %c0_i32 = arith.constant 0 : i32
    %c0_i32_0 = arith.constant 0 : i32
    return %c0_i32, %arg0 : i32, i32
  }
  func.func @transform_2(%arg0: i32) -> (i32, i32) {
    %c0_i32 = arith.constant 0 : i32
    %c0_i32_0 = arith.constant 0 : i32
    return %c0_i32, %arg0 : i32, i32
  }
  func.func @transform_3(%arg0: i32) -> (i32, i32) {
    %c0_i32 = arith.constant 0 : i32
    %c0_i32_0 = arith.constant 0 : i32
    return %c0_i32, %arg0 : i32, i32
  }
  func.func @transform_4(%arg0: i32) -> (i32, i32) {
    %c0_i32 = arith.constant 0 : i32
    %c0_i32_0 = arith.constant 0 : i32
    return %c0_i32, %arg0 : i32, i32
  }
  func.func @transform_5(%arg0: i32) -> (i32, i32) {
    %c0_i32 = arith.constant 0 : i32
    %c0_i32_0 = arith.constant 0 : i32
    return %c0_i32, %arg0 : i32, i32
  }
  func.func @transform_6(%arg0: i32) -> (i32, i32) {
    %c0_i32 = arith.constant 0 : i32
    %c0_i32_0 = arith.constant 0 : i32
    return %c0_i32, %arg0 : i32, i32
  }
  func.func @transform_7(%arg0: i32) -> (i32, i32) {
    %c0_i32 = arith.constant 0 : i32
    %c0_i32_0 = arith.constant 0 : i32
    return %c0_i32, %arg0 : i32, i32
  }
}

</mosaic_0001>

<llo_original>
// kernel: _bn_train_forward.1
$region0: #{_bn_train_forward.1}
  #allocation0 [shape = 'u32[]', space=smem, size = 0x4, offset = 0x4, fixed_abs, tag = 'smem constant byte address 0x4 - core index']
  #allocation1 [shape = 'u32[72,128]{1,0:T(1,128)}', space=vmem, size = 0x9000, scoped, tag = 'internal scratch']
  %s0 = inlined_call_operand.hbm [shape: f32[8,32], index: 0, kind: input, shape index: {}]
  %s1 = inlined_call_operand.vmem [shape: f32[1,32], index: 1, kind: input, shape index: {}]
  %s2 = inlined_call_operand.vmem [shape: f32[1,32], index: 2, kind: input, shape index: {}]
  %s3 = inlined_call_operand.vmem [shape: f32[1,32], index: 3, kind: input, shape index: {}]
  %s4 = inlined_call_operand.vmem [shape: f32[1,32], index: 4, kind: input, shape index: {}]
  %s5 = inlined_call_operand.hbm [shape: f32[8,32], index: 5, kind: output, shape index: {0}]
  %s6 = inlined_call_operand.hbm [shape: f32[1,32], index: 6, kind: output, shape index: {1}]
  %s7 = inlined_call_operand.hbm [shape: f32[1,32], index: 7, kind: output, shape index: {2}]
  %8 = xla_tuple %s5, %s6, %s7
  %s9 = sld [smem:[#allocation0]]
  $region50: #{_bn_train_forward.1} parent=0
    _
  %s11 = ssub.s32 1, %s9
  %s12 = scalar_select 0, %s11, %s9
  $region1: #{_bn_train_forward.1} parent=0
    #allocation2 [shape = 'u8[4096]{0}', space=vmem, size = 0x1000, scoped, tag = 'input window, operand 0, single buffered']
    #allocation3 [shape = 's32[1]{0}', space=sflag, size = 0x4, scoped, tag = 'scoped memory for _bn_train_forward.1']
    #allocation4 [shape = 's32[1]{0}', space=sflag, size = 0x4, scoped, tag = 'scoped memory for _bn_train_forward.1']
    #allocation5 [shape = 'u8[4096]{0}', space=vmem, size = 0x1000, scoped, tag = 'output window, operand 0, single buffered']
    #allocation6 [shape = 'u8[512]{0}', space=vmem, size = 0x400, scoped, tag = 'output window, operand 1, single buffered']
    #allocation7 [shape = 's32[1]{0}', space=sflag, size = 0x4, scoped, tag = 'scoped memory for _bn_train_forward.1']
    #allocation8 [shape = 'u8[512]{0}', space=vmem, size = 0x400, scoped, tag = 'output window, operand 2, single buffered']
    %13 = vsyncpa [#allocation3], 0
    %14 = vsyncpa [#allocation4], 0
    %15 = vsyncpa [#allocation7], 0
    // Predicated region
    $region2: #{_bn_train_forward.1} parent=1 // pred_check
      _
    $region3: #{_bn_train_forward.1} parent=1 // pred_check_branch
      %17 = sbr.rel (0) target = $region5
    $region4: #{_bn_train_forward.1} parent=1 // pred_region
      %19 = vsyncadd [#allocation3], 0
      %s21 = sshll.u32 %s0, 4
      %s22 = int_to_ptr.hbm [resolvable:$true] %s21
      %s23 = sshll.u32 [#allocation2], 4
      %s24 = int_to_ptr.vmem [resolvable:$true] %s23
      %26 = dma.hbm_to_vmem [thread:$0]  %s22, 128, %s24, [#allocation3]
    $region5: #{_bn_train_forward.1} parent=1 // pred_fallthru
      _
    // Predicated region
    $region6: #{_bn_train_forward.1} parent=1 // pred_check
      _
    $region7: #{_bn_train_forward.1} parent=1 // pred_check_branch
      %28 = sbr.rel (0) target = $region9
    $region8: #{_bn_train_forward.1} parent=1 // pred_region
      _
    $region9: #{_bn_train_forward.1} parent=1 // pred_fallthru
      _
    // Predicated region
    $region10: #{_bn_train_forward.1} parent=1 // pred_check
      _
    $region11: #{_bn_train_forward.1} parent=1 // pred_check_branch
      %30 = sbr.rel (0) target = $region13
    $region12: #{_bn_train_forward.1} parent=1 // pred_region
      _
    $region13: #{_bn_train_forward.1} parent=1 // pred_fallthru
      _
    // Predicated region
    $region14: #{_bn_train_forward.1} parent=1 // pred_check
      _
    $region15: #{_bn_train_forward.1} parent=1 // pred_check_branch
      %32 = sbr.rel (0) target = $region17
    $region16: #{_bn_train_forward.1} parent=1 // pred_region
      _
    $region17: #{_bn_train_forward.1} parent=1 // pred_fallthru
      _
    // Predicated region
    $region18: #{_bn_train_forward.1} parent=1 // pred_check
      _
    $region19: #{_bn_train_forward.1} parent=1 // pred_check_branch
      %34 = sbr.rel (0) target = $region21
    $region20: #{_bn_train_forward.1} parent=1 // pred_region
      _
    $region21: #{_bn_train_forward.1} parent=1 // pred_fallthru
      _
    // Predicated region
    $region22: #{_bn_train_forward.1} parent=1 // pred_check
      _
    $region23: #{_bn_train_forward.1} parent=1 // pred_check_branch
      %36 = sbr.rel (0) target = $region25
    $region24: #{_bn_train_forward.1} parent=1 // pred_region
      %38 = dma.done [#allocation3], 128
    $region25: #{_bn_train_forward.1} parent=1 // pred_fallthru
      _
    %v39 = vld [vmem:[#allocation2] sm:$0xff]
    %vm40 = vcmask 261120
    %v41 = vsel %vm40, %v39, 0.0
    %v42 = vrot.slane %v41, 4
    %v43 = vadd.f32 %v41, %v42
    %v44 = vrot.slane %v43, 2
    %v45 = vadd.f32 %v43, %v44
    %v46 = vrot.slane %v45, 1
    %v47 = vadd.f32 %v45, %v46
    %v48 = vmul.f32 %v47, 0.125
    %v49 = vsub.f32 %v39, %v48
    %v50 = vmul.f32 %v49, %v49
    %v51 = vsel %vm40, %v50, 0.0
    %v52 = vrot.slane %v51, 4
    %v53 = vadd.f32 %v51, %v52
    %v54 = vrot.slane %v53, 2
    %v55 = vadd.f32 %v53, %v54
    %v56 = vrot.slane %v55, 1
    %v57 = vadd.f32 %v55, %v56
    %v58 = vmul.f32 %v57, 0.125
    %v59 = vmul.f32 %v57, 0.14285715
    %v60 = vld [vmem:[%s1] sm:$0x1]
    %v61 = vld [vmem:[%s2] sm:$0x1]
    %v62 = vadd.f32 %v58, 1e-05
    %v63 = vrsqrt.pop %v62
    %v64 = vmul.f32 %v63, %v62
    %v65 = vmul.f32 %v64, %v63
    %v66 = vmul.f32 0.5, %v65
    %v67 = vsub.f32 1.5, %v66
    %v68 = vmul.f32 %v63, %v67
    %vm69 = vweird.f32 %v62
    %vm70 = vweird.f32 %v63
    %vm71 = vmor %vm69, %vm70
    %v72 = vsel %vm71, %v63, %v68
    %v73 = vmul.f32 %v60, %v72
    %v74 = vmul.f32 %v48, %v73
    %v75 = vsub.f32 %v61, %v74
    %v77 = vperm.slane %v73, 0
    %v79 = vmul.f32 %v39, %v77
    %v81 = vperm.slane %v75, 0
    %v83 = vadd.f32 %v79, %v81
    %84 = vst.msk [vmem:[#allocation5] sm:$0xff] %vm40, %v83
    %v85 = vld [vmem:[%s3] sm:$0x1]
    %v86 = vld [vmem:[%s4] sm:$0x1]
    %v87 = vmul.f32 %v85, 0.9
    %v88 = vmul.f32 %v48, 0.1
    %v89 = vadd.f32 %v87, %v88
    %vm90 = vcmask 253952
    %91 = vst.msk [vmem:[#allocation6] sm:$0x1] %vm90, %v89
    %v92 = vmul.f32 %v86, 0.9
    %v93 = vmul.f32 %v59, 0.1
    %v94 = vadd.f32 %v92, %v93
    %95 = vst.msk [vmem:[#allocation8] sm:$0x1] %vm90, %v94
    // Predicated region
    $region26: #{_bn_train_forward.1} parent=1 // pred_check
      _
    $region27: #{_bn_train_forward.1} parent=1 // pred_check_branch
      %97 = sbr.rel (0) target = $region29
    $region28: #{_bn_train_forward.1} parent=1 // pred_region
      %99 = vsyncadd [#allocation4], 0
      %s101 = sshll.u32 [#allocation5], 4
      %s102 = int_to_ptr.vmem [resolvable:$true] %s101
      %s103 = sshll.u32 %s5, 4
      %s104 = int_to_ptr.hbm [resolvable:$true] %s103
      %106 = dma.vmem_to_hbm [thread:$0]  %s102, 128, %s104, [#allocation4]
    $region29: #{_bn_train_forward.1} parent=1 // pred_fallthru
      _
    // Predicated region
    $region30: #{_bn_train_forward.1} parent=1 // pred_check
      _
    $region31: #{_bn_train_forward.1} parent=1 // pred_check_branch
      %108 = sbr.rel (0) target = $region33
    $region32: #{_bn_train_forward.1} parent=1 // pred_region
      %110 = vsyncadd [#allocation7], 0
      %s112 = sshll.u32 [#allocation6], 4
      %s113 = int_to_ptr.vmem [resolvable:$true] %s112
      %s114 = sshll.u32 %s6, 4
      %s115 = int_to_ptr.hbm [resolvable:$true] %s114
      %117 = dma.vmem_to_hbm [thread:$0]  %s113, 16, %s115, [#allocation7]
    $region33: #{_bn_train_forward.1} parent=1 // pred_fallthru
      _
    // Predicated region
    $region34: #{_bn_train_forward.1} parent=1 // pred_check
      _
    $region35: #{_bn_train_forward.1} parent=1 // pred_check_branch
      %119 = sbr.rel (0) target = $region37
    $region36: #{_bn_train_forward.1} parent=1 // pred_region
      %121 = vsyncadd [#allocation7], 0
      %s123 = sshll.u32 [#allocation8], 4
      %s124 = int_to_ptr.vmem [resolvable:$true] %s123
      %s125 = sshll.u32 %s7, 4
      %s126 = int_to_ptr.hbm [resolvable:$true] %s125
      %128 = dma.vmem_to_hbm [thread:$0]  %s124, 16, %s126, [#allocation7]
    $region37: #{_bn_train_forward.1} parent=1 // pred_fallthru
      _
    // Predicated region
    $region38: #{_bn_train_forward.1} parent=1 // pred_check
      _
    $region39: #{_bn_train_forward.1} parent=1 // pred_check_branch
      %130 = sbr.rel (0) target = $region41
    $region40: #{_bn_train_forward.1} parent=1 // pred_region
      %132 = dma.done [#allocation4], 128
    $region41: #{_bn_train_forward.1} parent=1 // pred_fallthru
      _
    // Predicated region
    $region42: #{_bn_train_forward.1} parent=1 // pred_check
      _
    $region43: #{_bn_train_forward.1} parent=1 // pred_check_branch
      %134 = sbr.rel (0) target = $region45
    $region44: #{_bn_train_forward.1} parent=1 // pred_region
      %136 = dma.done [#allocation7], 16
    $region45: #{_bn_train_forward.1} parent=1 // pred_fallthru
      _
    // Predicated region
    $region46: #{_bn_train_forward.1} parent=1 // pred_check
      _
    $region47: #{_bn_train_forward.1} parent=1 // pred_check_branch
      %138 = sbr.rel (0) target = $region49
    $region48: #{_bn_train_forward.1} parent=1 // pred_region
      %140 = dma.done [#allocation7], 16
    $region49: #{_bn_train_forward.1} parent=1 // pred_fallthru
      _
    %141 = vsyncpa [#allocation3], 1
    %142 = vsyncpa [#allocation4], 1
    %143 = vsyncpa [#allocation7], 1

</llo_original>
